<compile_context>
chip_gen: v6e
topology: v6e:2x2x1
jax: 0.10.0
libtpu: 0.0.40
codegen_flags: <defaults>
</compile_context>

<pallas_src>
import functools

import numpy as np
import jax
import jax.numpy as jnp
from jax.experimental import pallas as pl
from jax.experimental.pallas import tpu as pltpu


def _sinkhorn_kernel(m_ref, r_ref, c_ref, p_ref, done_ref, *,
                     gamma, eps, maxiters, logspace):
    """One batch element per grid step.

    Refs: m_ref (1,H,W), r_ref (1,H,1), c_ref (1,1,W), p_ref (1,H,W),
          done_ref SMEM (1,) int32 convergence flag.
    """
    M = m_ref[...]
    r = r_ref[...]
    c = c_ref[...]
    # Marginals normalized to sum to one (matches OptimalTransportFcn.forward).
    r = r / jnp.sum(r, axis=1, keepdims=True)
    c = c / jnp.sum(c, axis=2, keepdims=True)

    if logspace:
        p_ref[...] = jnp.power(M, gamma)
    else:
        p_ref[...] = jnp.exp(-gamma * (M - jnp.min(M, axis=2, keepdims=True)))
    done_ref[0] = jnp.int32(0)

    @pl.loop(0, maxiters)
    def _(_i):
        @pl.when(done_ref[0] == 0)
        def _():
            P = p_ref[...]
            alpha = jnp.sum(P, axis=2, keepdims=True)            # (1,H,1)
            alpha = jnp.where(alpha == 0.0, eps, alpha)
            P = (P / alpha) * r                                   # row step
            beta = jnp.sum(P, axis=1, keepdims=True)              # (1,1,W)
            beta = jnp.where(beta == 0.0, eps, beta)
            converged = jnp.max(jnp.abs(beta - c)) <= eps
            P_col = (P / beta) * c                                 # column step
            # Reference breaks *before* the column step -> return row-normalized P.
            p_ref[...] = jnp.where(converged, P, P_col)
            done_ref[0] = converged.astype(jnp.int32)


def optimal_transport(M, r=None, c=None, *, gamma=1.0, eps=1e-6,
                      maxiters=1000, logspace=False):
    """Functional equivalent of OptimalTransportLayer(gamma, eps, maxiters, logspace).forward(M, r, c)."""
    M = jnp.asarray(M, jnp.float32)
    orig_shape = M.shape
    if M.ndim == 2:
        M = M[None]
    elif M.ndim != 3:
        raise ValueError(
            f"The shape of the input tensor {orig_shape} does not match that of a matrix")
    B, H, W = M.shape
    if H == 1 and W == 1:
        return jnp.ones(orig_shape, jnp.float32)

    # None -> uniform marginals (docstring semantics); (1,H)/(1,W) broadcast over batch.
    if r is None:
        r = jnp.full((B, H), 1.0 / H, dtype=jnp.float32)
    else:
        r = jnp.broadcast_to(jnp.asarray(r, jnp.float32), (B, H))
    if c is None:
        c = jnp.full((B, W), 1.0 / W, dtype=jnp.float32)
    else:
        c = jnp.broadcast_to(jnp.asarray(c, jnp.float32), (B, W))
    r3 = r[:, :, None]      # (B, H, 1): H on sublanes -> broadcasts over W lanes in-kernel
    c3 = c[:, None, :]      # (B, 1, W): W on lanes

    kernel = functools.partial(
        _sinkhorn_kernel, gamma=float(gamma), eps=float(eps),
        maxiters=int(maxiters), logspace=bool(logspace))

    grid_spec = pltpu.PrefetchScalarGridSpec(
        num_scalar_prefetch=0,
        grid=(B,),
        in_specs=[
            pl.BlockSpec((1, H, W), lambda b: (b, 0, 0)),   # M, one batch element
            pl.BlockSpec((1, H, 1), lambda b: (b, 0, 0)),   # r
            pl.BlockSpec((1, 1, W), lambda b: (b, 0, 0)),   # c
        ],
        out_specs=pl.BlockSpec((1, H, W), lambda b: (b, 0, 0)),
        scratch_shapes=[pltpu.SMEM((1,), jnp.int32)],       # convergence flag
    )

    P = pl.pallas_call(
        kernel,
        out_shape=jax.ShapeDtypeStruct((B, H, W), jnp.float32),
        grid_spec=grid_spec,
        compiler_params=pltpu.CompilerParams(
            dimension_semantics=("parallel",)),
    )(M, r3, c3)
    return P.reshape(orig_shape)


def _reference_forward(M, r, c, gamma=1.0, eps=1e-6, maxiters=1000, logspace=False):
    """NumPy transliteration of the torch forward path (OptimalTransportFcn + _sinkhorn_inline)."""
    M = np.asarray(M, dtype=np.float32)
    orig_shape = M.shape
    if M.ndim == 2:
        M = M[None]
    B, H, W = M.shape
    if H == 1 and W == 1:
        return np.ones(orig_shape, dtype=np.float32)
    if r is None:
        r = np.full((1, H), 1.0 / H, dtype=np.float32)
    else:
        r = np.asarray(r, dtype=np.float32)
        r = r / np.sum(r, axis=1, keepdims=True)
    if c is None:
        c = np.full((1, W), 1.0 / W, dtype=np.float32)
    else:
        c = np.asarray(c, dtype=np.float32)
        c = c / np.sum(c, axis=1, keepdims=True)
    r3 = r[:, :, None]                       # (Br, H, 1)
    c3 = c[:, None, :]                       # (Bc, 1, W)
    if logspace:
        P = np.power(M, gamma).astype(np.float32)
    else:
        P = np.exp(-gamma * (M - np.min(M, axis=2, keepdims=True))).astype(np.float32)
    for _ in range(maxiters):
        alpha = np.sum(P, axis=2)            # (B, H)
        alpha[alpha == 0] = eps
        P = (P / alpha[:, :, None]) * r3
        beta = np.sum(P, axis=1)             # (B, W)
        beta[beta == 0] = eps
        # torch broadcast: beta (B,W) vs c (Bc,1,W) -> (Bc,B,W)
        if np.max(np.abs(beta[None, :, :] - c3)) <= eps:
            break
        P = (P / beta[:, None, :]) * c3
    return P.reshape(orig_shape)


if __name__ == "__main__":
    B, H, W = 2, 16, 128                      # small, lane-dense (W on 128-lane axis)
    gamma, eps, maxiters = 1.0, 1e-6, 1000    # layer defaults

    key = jax.random.PRNGKey(0)
    k_m, k_r = jax.random.split(key)
    # Cost matrices in [0, 1) and positive (unnormalized) row marginals.
    M = jax.random.uniform(k_m, (B, H, W), dtype=jnp.float32)
    r = jax.random.uniform(k_r, (B, H), dtype=jnp.float32, minval=0.5, maxval=1.5)

    # Batched case with explicit row marginals, uniform column marginals.
    P = optimal_transport(M, r=r, c=None, gamma=gamma, eps=eps, maxiters=maxiters)
    P = jax.block_until_ready(P)
    ref = _reference_forward(np.asarray(M), np.asarray(r), None, gamma, eps, maxiters)
    np.testing.assert_allclose(np.asarray(P), ref, rtol=2e-3, atol=1e-6)

    # 2-D single-matrix path with uniform marginals (exercises the reshape path).
    P2 = jax.block_until_ready(optimal_transport(M[0], gamma=gamma, eps=eps, maxiters=maxiters))
    ref2 = _reference_forward(np.asarray(M[0]), None, None, gamma, eps, maxiters)
    np.testing.assert_allclose(np.asarray(P2), ref2, rtol=2e-3, atol=1e-6)

    print("KERNEL_OK")
</pallas_src>

<mosaic_0001>
module attributes {stable_mosaic.version = 11 : i64} {
  func.func @_sinkhorn_kernel(%arg0: i32, %arg1: memref<1x16x128xf32, #tpu.memory_space<vmem>>, %arg2: memref<1x16x1xf32, #tpu.memory_space<vmem>>, %arg3: memref<1x1x128xf32, #tpu.memory_space<vmem>>, %arg4: memref<1x16x128xf32, #tpu.memory_space<vmem>>, %arg5: memref<1xi32, #tpu.memory_space<smem>>) attributes {dimension_semantics = [#tpu.dimension_semantics<parallel>], iteration_bounds = array<i64: 2>, scalar_prefetch = 0 : i64, scratch_operands = 1 : i64, tpu.core_type = #tpu.core_type<tc>, window_params = [{transform_indices = @transform_0, window_bounds = array<i64: 1, 16, 128>}, {transform_indices = @transform_1, window_bounds = array<i64: 1, 16, 1>}, {transform_indices = @transform_2, window_bounds = array<i64: 1, 1, 128>}, {transform_indices = @transform_3, window_bounds = array<i64: 1, 16, 128>}]} {
    %c0 = arith.constant 0 : index
    %c0_0 = arith.constant 0 : index
    %c0_1 = arith.constant 0 : index
    %0 = vector.load %arg1[%c0, %c0_0, %c0_1] : memref<1x16x128xf32, #tpu.memory_space<vmem>>, vector<1x16x128xf32>
    %c0_2 = arith.constant 0 : index
    %c0_3 = arith.constant 0 : index
    %c0_4 = arith.constant 0 : index
    %1 = vector.load %arg2[%c0_2, %c0_3, %c0_4] : memref<1x16x1xf32, #tpu.memory_space<vmem>>, vector<1x16x1xf32>
    %c0_5 = arith.constant 0 : index
    %c0_6 = arith.constant 0 : index
    %c0_7 = arith.constant 0 : index
    %2 = vector.load %arg3[%c0_5, %c0_6, %c0_7] : memref<1x1x128xf32, #tpu.memory_space<vmem>>, vector<1x1x128xf32>
    %cst = arith.constant dense<0.000000e+00> : vector<1x1xf32>
    %3 = vector.multi_reduction <add>, %1, %cst [1] : vector<1x16x1xf32> to vector<1x1xf32>
    %4 = vector.shape_cast %3 : vector<1x1xf32> to vector<1x1x1xf32>
    %5 = vector.broadcast %4 : vector<1x1x1xf32> to vector<1x16x1xf32>
    %6 = arith.divf %1, %5 : vector<1x16x1xf32>
    %cst_8 = arith.constant dense<0.000000e+00> : vector<1x1xf32>
    %7 = vector.multi_reduction <add>, %2, %cst_8 [2] : vector<1x1x128xf32> to vector<1x1xf32>
    %8 = vector.shape_cast %7 : vector<1x1xf32> to vector<1x1x1xf32>
    %9 = vector.broadcast %8 : vector<1x1x1xf32> to vector<1x1x128xf32>
    %10 = arith.divf %2, %9 : vector<1x1x128xf32>
    %cst_9 = arith.constant dense<0x7F800000> : vector<1x16xf32>
    %11 = vector.multi_reduction <minimumf>, %0, %cst_9 [2] : vector<1x16x128xf32> to vector<1x16xf32>
    %12 = vector.shape_cast %11 : vector<1x16xf32> to vector<1x16x1xf32>
    %13 = vector.broadcast %12 : vector<1x16x1xf32> to vector<1x16x128xf32>
    %14 = arith.subf %0, %13 : vector<1x16x128xf32>
    %cst_10 = arith.constant -1.000000e+00 : f32
    %15 = vector.broadcast %cst_10 : f32 to vector<1x16x128xf32>
    %16 = arith.mulf %15, %14 : vector<1x16x128xf32>
    %17 = math.exp %16 : vector<1x16x128xf32>
    %c0_11 = arith.constant 0 : index
    %c0_12 = arith.constant 0 : index
    %c0_13 = arith.constant 0 : index
    %18 = vector.load %arg4[%c0_11, %c0_12, %c0_13] : memref<1x16x128xf32, #tpu.memory_space<vmem>>, vector<1x16x128xf32>
    tpu.vector_store %arg4[%c0_11, %c0_12, %c0_13], %17 {strides = array<i32>} : memref<1x16x128xf32, #tpu.memory_space<vmem>>, vector<1x16x128xf32>,
    %c0_i32 = arith.constant 0 : i32
    %c0_14 = arith.constant 0 : index
    %19 = memref.load %arg5[%c0_14] : memref<1xi32, #tpu.memory_space<smem>>
    memref.store %c0_i32, %arg5[%c0_14] : memref<1xi32, #tpu.memory_space<smem>>
    %c0_i32_15 = arith.constant 0 : i32
    %c1000_i32 = arith.constant 1000 : i32
    %20 = arith.addi %c0_i32_15, %c1000_i32 : i32
    %c1_i32 = arith.constant 1 : i32
    scf.for %arg6 = %c0_i32_15 to %20 step %c1_i32  : i32 {
      %c0_16 = arith.constant 0 : index
      %21 = memref.load %arg5[%c0_16] : memref<1xi32, #tpu.memory_space<smem>>
      %c0_i32_17 = arith.constant 0 : i32
      %22 = arith.cmpi eq, %21, %c0_i32_17 : i32
      %23 = arith.extui %22 : i1 to i32
      %c0_i32_18 = arith.constant 0 : i32
      %24 = arith.cmpi ne, %23, %c0_i32_18 : i32
      scf.if %24 {
        %c0_19 = arith.constant 0 : index
        %c0_20 = arith.constant 0 : index
        %c0_21 = arith.constant 0 : index
        %25 = vector.load %arg4[%c0_19, %c0_20, %c0_21] : memref<1x16x128xf32, #tpu.memory_space<vmem>>, vector<1x16x128xf32>
        %cst_22 = arith.constant dense<0.000000e+00> : vector<1x16xf32>
        %26 = vector.multi_reduction <add>, %25, %cst_22 [2] : vector<1x16x128xf32> to vector<1x16xf32>
        %27 = vector.shape_cast %26 : vector<1x16xf32> to vector<1x16x1xf32>
        %cst_23 = arith.constant 0.000000e+00 : f32
        %28 = vector.broadcast %cst_23 : f32 to vector<1x16x1xf32>
        %29 = arith.cmpf oeq, %27, %28 : vector<1x16x1xf32>
        %cst_24 = arith.constant 9.99999997E-7 : f32
        %30 = vector.broadcast %cst_24 : f32 to vector<1x16x1xf32>
        %31 = arith.select %29, %30, %27 : vector<1x16x1xi1>, vector<1x16x1xf32>
        %32 = vector.broadcast %31 : vector<1x16x1xf32> to vector<1x16x128xf32>
        %33 = arith.divf %25, %32 : vector<1x16x128xf32>
        %34 = vector.broadcast %6 : vector<1x16x1xf32> to vector<1x16x128xf32>
        %35 = arith.mulf %33, %34 : vector<1x16x128xf32>
        %cst_25 = arith.constant dense<0.000000e+00> : vector<1x128xf32>
        %36 = vector.multi_reduction <add>, %35, %cst_25 [1] : vector<1x16x128xf32> to vector<1x128xf32>
        %37 = vector.shape_cast %36 : vector<1x128xf32> to vector<1x1x128xf32>
        %cst_26 = arith.constant 0.000000e+00 : f32
        %38 = vector.broadcast %cst_26 : f32 to vector<1x1x128xf32>
        %39 = arith.cmpf oeq, %37, %38 : vector<1x1x128xf32>
        %cst_27 = arith.constant 9.99999997E-7 : f32
        %40 = vector.broadcast %cst_27 : f32 to vector<1x1x128xf32>
        %41 = arith.select %39, %40, %37 : vector<1x1x128xi1>, vector<1x1x128xf32>
        %42 = arith.subf %41, %10 : vector<1x1x128xf32>
        %43 = math.absf %42 : vector<1x1x128xf32>
        %44 = vector.shape_cast %43 : vector<1x1x128xf32> to vector<1x1x1x128xf32>
        %cst_28 = arith.constant dense<0xFF800000> : vector<1xf32>
        %45 = vector.multi_reduction <maximumf>, %44, %cst_28 [1, 2, 3] : vector<1x1x1x128xf32> to vector<1xf32>
        %46 = vector.shape_cast %45 : vector<1xf32> to vector<1x1x1x1xf32>
        %47 = vector.extract %46[0, 0, 0, 0] : f32 from vector<1x1x1x1xf32>
        %cst_29 = arith.constant 9.99999997E-7 : f32
        %48 = arith.cmpf ole, %47, %cst_29 : f32
        %49 = vector.broadcast %41 : vector<1x1x128xf32> to vector<1x16x128xf32>
        %50 = arith.divf %35, %49 : vector<1x16x128xf32>
        %51 = vector.broadcast %10 : vector<1x1x128xf32> to vector<1x16x128xf32>
        %52 = arith.mulf %50, %51 : vector<1x16x128xf32>
        %53 = arith.select %48, %35, %52 : vector<1x16x128xf32>
        %c0_30 = arith.constant 0 : index
        %c0_31 = arith.constant 0 : index
        %c0_32 = arith.constant 0 : index
        %54 = vector.load %arg4[%c0_30, %c0_31, %c0_32] : memref<1x16x128xf32, #tpu.memory_space<vmem>>, vector<1x16x128xf32>
        tpu.vector_store %arg4[%c0_30, %c0_31, %c0_32], %53 {strides = array<i32>} : memref<1x16x128xf32, #tpu.memory_space<vmem>>, vector<1x16x128xf32>,
        %55 = arith.extui %48 : i1 to i32
        %c0_33 = arith.constant 0 : index
        %56 = memref.load %arg5[%c0_33] : memref<1xi32, #tpu.memory_space<smem>>
        memref.store %55, %arg5[%c0_33] : memref<1xi32, #tpu.memory_space<smem>>
      } else {
      }
    }
    return
  }
  func.func @transform_0(%arg0: i32) -> (i32, i32, i32) {
    %c0_i32 = arith.constant 0 : i32
    %c0_i32_0 = arith.constant 0 : i32
    %c0_i32_1 = arith.constant 0 : i32
    return %arg0, %c0_i32, %c0_i32_0 : i32, i32, i32
  }
  func.func @transform_1(%arg0: i32) -> (i32, i32, i32) {
    %c0_i32 = arith.constant 0 : i32
    %c0_i32_0 = arith.constant 0 : i32
    %c0_i32_1 = arith.constant 0 : i32
    return %arg0, %c0_i32, %c0_i32_0 : i32, i32, i32
  }
  func.func @transform_2(%arg0: i32) -> (i32, i32, i32) {
    %c0_i32 = arith.constant 0 : i32
    %c0_i32_0 = arith.constant 0 : i32
    %c0_i32_1 = arith.constant 0 : i32
    return %arg0, %c0_i32, %c0_i32_0 : i32, i32, i32
  }
  func.func @transform_3(%arg0: i32) -> (i32, i32, i32) {
    %c0_i32 = arith.constant 0 : i32
    %c0_i32_0 = arith.constant 0 : i32
    %c0_i32_1 = arith.constant 0 : i32
    return %arg0, %c0_i32, %c0_i32_0 : i32, i32, i32
  }
}

</mosaic_0001>

<llo_original>
// kernel: tpu_custom_call.1
$region0: #{tpu_custom_call.1}
  #allocation0 [shape = 'u32[]', space=smem, size = 0x4, offset = 0x4, fixed_abs, tag = 'smem constant byte address 0x4 - core index']
  #allocation1 [shape = 'u32[144,128]{1,0:T(1,128)}', space=vmem, size = 0x12000, scoped, tag = 'internal scratch']
  #allocation2 [shape = 's32[1]{0:T(128)}', space=smem, size = 0x200, scoped, tag = 'scratch operand']
  %s0 = inlined_call_operand.vmem [shape: f32[2,16,128], index: 0, kind: input, shape index: {}]
  %s1 = inlined_call_operand.vmem [shape: f32[2,16,1], index: 1, kind: input, shape index: {}]
  %s2 = inlined_call_operand.vmem [shape: f32[2,1,128], index: 2, kind: input, shape index: {}]
  %s3 = inlined_call_operand.hbm [shape: f32[2,16,128], index: 3, kind: output, shape index: {}]
  %s4 = sld [smem:[#allocation0]]
  $region56: #{tpu_custom_call.1} parent=0
    _
  %s6 = ssub.s32 1, %s4
  %s7 = scalar_select 0, %s6, %s4
  $region1: #{tpu_custom_call.1} parent=0
    #allocation3 [shape = 'u8[16384]{0}', space=vmem, size = 0x4000, scoped, tag = 'output window, operand 0']
    #allocation4 [shape = 's32[2]{0}', space=sflag, size = 0x8, scoped, tag = 'scoped memory for tpu_custom_call.1']
    %8 = vsyncpa [#allocation4], 0
    %s9 = scalar_lea.sflag [#allocation4], 1
    %10 = vsyncpa %s9, 0
    loop: start=0, step=1, limit=4
    $region2: #{tpu_custom_call.1} parent=1 // loop_pre_header
      _
    $region3: #{tpu_custom_call.1} parent=1 // loop_header
      %s12 = sphi 0, %s16
      %p13 = scmp.ge.s32.totalorder %s12, 4
      %s22 = sphi 0, %s24
      %s25 = sphi 0, %s22
      %s26 = sphi 0, %s25
      %s42 = sphi 0, %s26
      %s48 = sphi 0, %s50
      %s51 = sphi 0, %s48
      %s52 = sphi 0, %s51
      %s68 = sphi 0, %s52
      %s74 = sphi 0, %s76
      %s77 = sphi 0, %s74
      %s78 = sphi 0, %s77
      %s94 = sphi 0, %s78
      %s100 = sphi 0, %s102
      %s103 = sphi 0, %s100
      %s104 = sphi 0, %s103
      %s120 = sphi 0, %s104
    $region4: #{tpu_custom_call.1} parent=1 // loop_header_branch
      %15 = sbr.rel (%p13) target = $region8
    $region5: #{tpu_custom_call.1} parent=1 // loop_body
      %s17 = ssub.s32 %s12, 1
      %s18 = ssub.s32 %s12, 2
      %s19 = sadd.s32 %s12, 1
      %s20 = ssub.s32 %s12, %s19
      %p21 = scmp.eq.s32.totalorder %s20, 0
      %s23 = sadd.s32 %s22, 1
      %s24 = scalar_select %p21, %s22, %s23
      %p27 = pneg %p21
      %p28 = scmp.eq.s32.totalorder %s12, 1
      %p29 = por %p27, %p28
      %p30 = scmp.ne.s32.totalorder %s22, %s25
      %p31 = scmp.eq.s32.totalorder %s12, 0
      %p32 = por %p30, %p31
      %p33 = scmp.ne.s32.totalorder %s22, %s25
      %p34 = scmp.eq.s32.totalorder %s17, 1
      %p35 = por %p33, %p34
      %p36 = scmp.ne.s32.totalorder %s25, %s26
      %p37 = scmp.eq.s32.totalorder %s17, 0
      %p38 = por %p36, %p37
      %p39 = scmp.ne.s32.totalorder %s25, %s26
      %p40 = scmp.eq.s32.totalorder %s18, 1
      %p41 = por %p39, %p40
      %p43 = scmp.ne.s32.totalorder %s26, %s42
      %p44 = scmp.eq.s32.totalorder %s18, 0
      %p45 = por %p43, %p44
      %s46 = ssub.s32 %s12, %s19
      %p47 = scmp.eq.s32.totalorder %s46, 0
      %s49 = sadd.s32 %s48, 1
      %s50 = scalar_select %p47, %s48, %s49
      %p53 = pneg %p47
      %p54 = scmp.eq.s32.totalorder %s12, 1
      %p55 = por %p53, %p54
      %p56 = scmp.ne.s32.totalorder %s48, %s51
      %p57 = scmp.eq.s32.totalorder %s12, 0
      %p58 = por %p56, %p57
      %p59 = scmp.ne.s32.totalorder %s48, %s51
      %p60 = scmp.eq.s32.totalorder %s17, 1
      %p61 = por %p59, %p60
      %p62 = scmp.ne.s32.totalorder %s51, %s52
      %p63 = scmp.eq.s32.totalorder %s17, 0
      %p64 = por %p62, %p63
      %p65 = scmp.ne.s32.totalorder %s51, %s52
      %p66 = scmp.eq.s32.totalorder %s18, 1
      %p67 = por %p65, %p66
      %p69 = scmp.ne.s32.totalorder %s52, %s68
      %p70 = scmp.eq.s32.totalorder %s18, 0
      %p71 = por %p69, %p70
      %s72 = ssub.s32 %s12, %s19
      %p73 = scmp.eq.s32.totalorder %s72, 0
      %s75 = sadd.s32 %s74, 1
      %s76 = scalar_select %p73, %s74, %s75
      %p79 = pneg %p73
      %p80 = scmp.eq.s32.totalorder %s12, 1
      %p81 = por %p79, %p80
      %p82 = scmp.ne.s32.totalorder %s74, %s77
      %p83 = scmp.eq.s32.totalorder %s12, 0
      %p84 = por %p82, %p83
      %p85 = scmp.ne.s32.totalorder %s74, %s77
      %p86 = scmp.eq.s32.totalorder %s17, 1
      %p87 = por %p85, %p86
      %p88 = scmp.ne.s32.totalorder %s77, %s78
      %p89 = scmp.eq.s32.totalorder %s17, 0
      %p90 = por %p88, %p89
      %p91 = scmp.ne.s32.totalorder %s77, %s78
      %p92 = scmp.eq.s32.totalorder %s18, 1
      %p93 = por %p91, %p92
      %p95 = scmp.ne.s32.totalorder %s78, %s94
      %p96 = scmp.eq.s32.totalorder %s18, 0
      %p97 = por %p95, %p96
      %s98 = ssub.s32 %s12, %s19
      %p99 = scmp.eq.s32.totalorder %s98, 0
      %s101 = sadd.s32 %s100, 1
      %s102 = scalar_select %p99, %s100, %s101
      %p105 = pneg %p99
      %p106 = scmp.eq.s32.totalorder %s12, 1
      %p107 = por %p105, %p106
      %p108 = scmp.ne.s32.totalorder %s100, %s103
      %p109 = scmp.eq.s32.totalorder %s12, 0
      %p110 = por %p108, %p109
      %p111 = scmp.ne.s32.totalorder %s100, %s103
      %p112 = scmp.eq.s32.totalorder %s17, 1
      %p113 = por %p111, %p112
      %p114 = scmp.ne.s32.totalorder %s103, %s104
      %p115 = scmp.eq.s32.totalorder %s17, 0
      %p116 = por %p114, %p115
      %p117 = scmp.ne.s32.totalorder %s103, %s104
      %p118 = scmp.eq.s32.totalorder %s18, 1
      %p119 = por %p117, %p118
      %p121 = scmp.ne.s32.totalorder %s104, %s120
      %p122 = scmp.eq.s32.totalorder %s18, 0
      %p123 = por %p121, %p122
      %p124 = scmp.le.s32.totalorder 1, %s12
      %p125 = scmp.lt.s32.totalorder %s12, 3
      %p126 = pnand %p124, %p125
      %p127 = pneg %p126
      // Predicated region
      $region9: #{tpu_custom_call.1} parent=5 // pred_check
        _
      $region10: #{tpu_custom_call.1} parent=5 // pred_check_branch
        %129 = sbr.rel (%p126) target = $region12
      $region11: #{tpu_custom_call.1} parent=5 // pred_region
        %s130 = ssub.s32 %s12, 1
      $region12: #{tpu_custom_call.1} parent=5 // pred_fallthru
        _
      %p131 = scmp.lt.s32.totalorder %s12, 2
      // Predicated region
      $region13: #{tpu_custom_call.1} parent=5 // pred_check
        %p132 = pneg %p131
      $region14: #{tpu_custom_call.1} parent=5 // pred_check_branch
        %134 = sbr.rel (%p132) target = $region16
      $region15: #{tpu_custom_call.1} parent=5 // pred_region
        // Predicated region
        $region17: #{tpu_custom_call.1} parent=15 // pred_check
          %p135 = pneg %p32
        $region18: #{tpu_custom_call.1} parent=15 // pred_check_branch
          %137 = sbr.rel (%p135) target = $region20
        $region19: #{tpu_custom_call.1} parent=15 // pred_region
          %p138 = scmp.lt.s32.totalorder %s12, 1
          %s139 = scalar_select %p138, %s12, 1
          %s140 = smul.addr %s139, 2
          %s141 = smul.addr %s140, 8
          %s142 = scalar_lea.vmem %s0, %s141
        $region20: #{tpu_custom_call.1} parent=15 // pred_fallthru
          _
        // Predicated region
        $region21: #{tpu_custom_call.1} parent=15 // pred_check
          %p143 = pneg %p58
        $region22: #{tpu_custom_call.1} parent=15 // pred_check_branch
          %145 = sbr.rel (%p143) target = $region24
        $region23: #{tpu_custom_call.1} parent=15 // pred_region
          %p146 = scmp.lt.s32.totalorder %s12, 1
          %s147 = scalar_select %p146, %s12, 1
          %s148 = smul.addr %s147, 2
          %s149 = smul.addr %s148, 8
          %s150 = scalar_lea.vmem %s1, %s149
        $region24: #{tpu_custom_call.1} parent=15 // pred_fallthru
          _
        // Predicated region
        $region25: #{tpu_custom_call.1} parent=15 // pred_check
          %p151 = pneg %p84
        $region26: #{tpu_custom_call.1} parent=15 // pred_check_branch
          %153 = sbr.rel (%p151) target = $region28
        $region27: #{tpu_custom_call.1} parent=15 // pred_region
          %p154 = scmp.lt.s32.totalorder %s12, 1
          %s155 = scalar_select %p154, %s12, 1
          %s156 = scalar_lea.vmem %s2, %s155
        $region28: #{tpu_custom_call.1} parent=15 // pred_fallthru
          _
      $region16: #{tpu_custom_call.1} parent=5 // pred_fallthru
        _
      %p157 = scmp.le.s32.totalorder 1, %s12
      %p158 = scmp.lt.s32.totalorder %s12, 3
      %p159 = pnand %p157, %p158
      %p160 = pneg %p159
      // Predicated region
      $region29: #{tpu_custom_call.1} parent=5 // pred_check
        _
      $region30: #{tpu_custom_call.1} parent=5 // pred_check_branch
        %162 = sbr.rel (%p159) target = $region32
      $region31: #{tpu_custom_call.1} parent=5 // pred_region
        %s163 = ssub.s32 %s12, 1
        %p164 = scmp.lt.s32.totalorder %s17, 1
        %s165 = scalar_select %p164, %s17, 1
        %s166 = smul.addr %s165, 2
        %s167 = smul.addr %s166, 8
        %s168 = scalar_lea.vmem %s0, %s167
        %p169 = pneg %p38
        %p170 = pneg %p35
        %p171 = scmp.lt.s32.totalorder %s17, 1
        %s172 = scalar_select %p171, %s17, 1
        %s173 = smul.addr %s172, 2
        %s174 = smul.addr %s173, 8
        %s175 = scalar_lea.vmem %s1, %s174
        %p176 = pneg %p64
        %p177 = pneg %p61
        %p178 = scmp.lt.s32.totalorder %s17, 1
        %s179 = scalar_select %p178, %s17, 1
        %s180 = scalar_lea.vmem %s2, %s179
        %p181 = pneg %p90
        %p182 = pneg %p87
        %p183 = pneg %p116
        %p184 = pneg %p113
        %s185 = sand.u32 %s103, 1
        %s186 = scalar_lea.sflag [#allocation4], %s185
        %s187 = sand.u32 %s103, 1
        %s188 = smul.addr %s187, 16
        %s189 = scalar_lea.vmem [#allocation3], %s188
        %p190 = scmp.lt.s32.totalorder %s17, 1
        %s191 = scalar_select %p190, %s17, 1
        %s192 = smul.addr %s191, 2
        %s193 = smul.addr %s192, 8
        %s194 = scalar_lea.vmem %s0, %s193
        %p195 = scmp.lt.s32.totalorder %s17, 1
        %s196 = scalar_select %p195, %s17, 1
        %s197 = smul.addr %s196, 2
        %s198 = smul.addr %s197, 8
        %s199 = scalar_lea.vmem %s1, %s198
        %p200 = scmp.lt.s32.totalorder %s17, 1
        %s201 = scalar_select %p200, %s17, 1
        %s202 = scalar_lea.vmem %s2, %s201
        %v203 = vld [vmem:[%s194] sm:$0xff]
        %v204 = vld [vmem:[%s194 + $0x8] sm:$0xff]
        %v205 = vld [vmem:[%s199] sm:$0xff]
        %v206 = vld [vmem:[%s199 + $0x8] sm:$0xff]
        %v207 = vld [vmem:[%s202] sm:$0x1]
        %vm208 = vcmask 7168
        %v209 = vsel %vm208, %v205, 0.0
        %v210 = vsel %vm208, %v206, 0.0
        %v211 = vadd.f32 %v209, %v210
        %v212 = vrot.slane %v211, 4
        %v213 = vadd.f32 %v211, %v212
        %v214 = vrot.slane %v213, 2
        %v215 = vadd.f32 %v213, %v214
        %v216 = vrot.slane %v215, 1
        %v217 = vadd.f32 %v215, %v216
        %v218 = vrcp.pop %v217
        %v219 = vmul.f32 %v205, %v218
        %v220 = vmul.f32 %v206, %v218
        %vm221 = vcmask 1040384
        %v222 = vsel %vm221, %v207, 0.0
        %223 = vadd.xlane.f32.xlu0 %v222
        %v224 = vpop.xlane.xlu0 %223
        %v225 = vrcp.pop %v224
        %v226 = vmul.f32 %v207, %v225
        %227 = vmin.xlane.f32.xlu0 %v203
        %v228 = vpop.xlane.xlu0 %227
        %229 = vmin.xlane.f32.xlu0 %v204
        %v230 = vpop.xlane.xlu0 %229
        %v231 = vsub.f32 %v203, %v228
        %v232 = vsub.f32 %v204, %v230
        %v233 = vmul.f32 %v231, -1.0
        %v234 = vmul.f32 %v232, -1.0
        %v235 = vmul.f32 %v233, 1.442695
        %v236 = vpow.pop %v235
        %v237 = vmul.f32 %v234, 1.442695
        %v238 = vpow.pop %v237
        %239 = vst [vmem:[%s189] sm:$0xff] %v236
        %240 = vst [vmem:[%s189 + $0x8] sm:$0xff] %v238
        %s241 = scalar_lea.smem [#allocation2], 0
        %242 = sst [smem:[%s241]] 0
        loop: start=0, step=1, limit=1000
        $region33: #{tpu_custom_call.1} parent=31 // loop_pre_header
          _
        $region34: #{tpu_custom_call.1} parent=31 // loop_header
          %s244 = sphi 0, %s248
          %p245 = scmp.ge.s32.totalorder %s244, 1000
        $region35: #{tpu_custom_call.1} parent=31 // loop_header_branch
          %247 = sbr.rel (%p245) target = $region39
        $region36: #{tpu_custom_call.1} parent=31 // loop_body
          %s249 = sld [smem:[#allocation2]]
          %p250 = scmp.eq.s32.totalorder %s249, 0
          // Predicated region
          $region40: #{tpu_custom_call.1} parent=36 // pred_check
            %p251 = pneg %p250
          $region41: #{tpu_custom_call.1} parent=36 // pred_check_branch
            %253 = sbr.rel (%p251) target = $region43
          $region42: #{tpu_custom_call.1} parent=36 // pred_region
            %v254 = vld [vmem:[%s189] sm:$0xff]
            %v255 = vld [vmem:[%s189 + $0x8] sm:$0xff]
            %256 = vadd.xlane.f32.xlu0 %v254
            %v257 = vpop.xlane.xlu0 %256
            %258 = vadd.xlane.f32.xlu0 %v255
            %v259 = vpop.xlane.xlu0 %258
            %vm260 = vcmp.eq.f32.partialorder %v257, 0.0
            %vm261 = vcmp.eq.f32.partialorder %v259, 0.0
            %v262 = vsel %vm260, 1e-06, %v257
            %v263 = vsel %vm261, 1e-06, %v259
            %v264 = vrcp.pop %v262
            %v265 = vmul.f32 %v254, %v264
            %v266 = vrcp.pop %v263
            %v267 = vmul.f32 %v255, %v266
            %269 = vset.pattern.permute.xlu0 0
            %270 = vperm.xlu0 %269, %v219
            %v271 = vpop.permute.xlu0 %270
            %274 = vset.pattern.permute.xlu0 0
            %275 = vperm.xlu0 %274, %v220
            %v276 = vpop.permute.xlu0 %275
            %v278 = vmul.f32 %v265, %v271
            %v279 = vmul.f32 %v267, %v276
            %v280 = vadd.f32 %v278, %v279
            %v281 = vrot.slane %v280, 4
            %v282 = vadd.f32 %v280, %v281
            %v283 = vrot.slane %v282, 2
            %v284 = vadd.f32 %v282, %v283
            %v285 = vrot.slane %v284, 1
            %v286 = vadd.f32 %v284, %v285
            %vm287 = vcmp.eq.f32.partialorder %v286, 0.0
            %v288 = vsel %vm287, 1e-06, %v286
            %v289 = vsub.f32 %v288, %v226
            %v290 = vand.u32 2147483647, %v289
            %v291 = vsel %vm221, %v290, -inf
            %292 = vmax.xlane.f32.xlu0 %v291
            %v293 = vpop.xlane.xlu0 %292
            %v294 = vrot.slane %v293, 4
            %v295 = vmax.f32 %v293, %v294
            %v296 = vrot.slane %v295, 2
            %v297 = vmax.f32 %v295, %v296
            %v298 = vrot.slane %v297, 1
            %v299 = vmax.f32 %v297, %v298
            %s300 = vtos %v299
            %p301 = scmp.le.f32.partialorder %s300, 1e-06
            %v302 = vrcp.pop %v288
            %v303 = vmul.f32 %v278, %v302
            %v304 = vmul.f32 %v279, %v302
            %v306 = vlaneseq
            %v307 = vshrl.u32 %v306, 7
            %v308 = vsub.s32 0, %v307
            %v309 = vrot.slane %v226, %v308
            %v311 = vmul.f32 %v303, %v309
            %v312 = vmul.f32 %v304, %v309
            %s313 = scalar_select %p301, 1, 0
            %v314 = vstv %s313
            %vm315 = vcmp.eq.s32.totalorder %v314, 1
            %v316 = vsel %vm315, %v278, %v311
            %v317 = vsel %vm315, %v279, %v312
            %318 = vst [vmem:[%s189] sm:$0xff] %v316
            %319 = vst [vmem:[%s189 + $0x8] sm:$0xff] %v317
            %320 = sst [smem:[%s241]] %s313
          $region43: #{tpu_custom_call.1} parent=36 // pred_fallthru
            _
        $region37: #{tpu_custom_call.1} parent=31 // loop_footer
          %s248 = sadd.s32 1, %s244
        $region38: #{tpu_custom_call.1} parent=31 // loop_footer_branch
          %243 = sbr.rel target = $region34
        $region39: #{tpu_custom_call.1} parent=31 // loop_exit
          _
        %s321 = sand.u32 %s103, 1
        %s322 = scalar_lea.sflag [#allocation4], %s321
        %s323 = sand.u32 %s103, 1
        %s324 = smul.addr %s323, 16
        %s325 = scalar_lea.vmem [#allocation3], %s324
        // Predicated region
        $region44: #{tpu_custom_call.1} parent=31 // pred_check
          %p326 = pneg %p113
        $region45: #{tpu_custom_call.1} parent=31 // pred_check_branch
          %328 = sbr.rel (%p326) target = $region47
        $region46: #{tpu_custom_call.1} parent=31 // pred_region
          %s330 = ssub.s32 256, 256
          %331 = vsyncadd %s322, %s330
          %s332 = smul.addr %s17, 2
          %s333 = smul.addr %s332, 128
          %s334 = scalar_lea.hbm %s3, %s333
          %s335 = sshll.u32 %s325, 4
          %s336 = int_to_ptr.vmem [resolvable:$true] %s335
          %341 = dma.vmem_to_hbm [thread:$0]  %s336, 256, %s334, %s322, 128, 128, 8
        $region47: #{tpu_custom_call.1} parent=31 // pred_fallthru
          _
      $region32: #{tpu_custom_call.1} parent=5 // pred_fallthru
        _
      %p342 = scmp.le.s32.totalorder 2, %s12
      // Predicated region
      $region48: #{tpu_custom_call.1} parent=5 // pred_check
        %p343 = pneg %p342
      $region49: #{tpu_custom_call.1} parent=5 // pred_check_branch
        %345 = sbr.rel (%p343) target = $region51
      $region50: #{tpu_custom_call.1} parent=5 // pred_region
        %s346 = ssub.s32 %s12, 2
        // Predicated region
        $region52: #{tpu_custom_call.1} parent=50 // pred_check
          %p347 = pneg %p119
        $region53: #{tpu_custom_call.1} parent=50 // pred_check_branch
          %349 = sbr.rel (%p347) target = $region55
        $region54: #{tpu_custom_call.1} parent=50 // pred_region
          %s350 = sand.u32 %s104, 1
          %s351 = scalar_lea.sflag [#allocation4], %s350
          %s352 = sand.u32 %s104, 1
          %s353 = smul.addr %s352, 16
          %s354 = scalar_lea.vmem [#allocation3], %s353
          %355 = dma.done %s351, 256
        $region55: #{tpu_custom_call.1} parent=50 // pred_fallthru
          _
      $region51: #{tpu_custom_call.1} parent=5 // pred_fallthru
        _
    $region6: #{tpu_custom_call.1} parent=1 // loop_footer
      %s16 = sadd.s32 1, %s12
    $region7: #{tpu_custom_call.1} parent=1 // loop_footer_branch
      %11 = sbr.rel target = $region3
    $region8: #{tpu_custom_call.1} parent=1 // loop_exit
      _
    %356 = vsyncpa [#allocation4], 1
    %s357 = scalar_lea.sflag [#allocation4], 1
    %358 = vsyncpa %s357, 1

</llo_original>
